<compile_context>
chip_gen: v7x
topology: tpu7x:2x2x1
jax: 0.10.0
libtpu: 0.0.40
codegen_flags: <defaults>
</compile_context>

<pallas_src>
import functools

import jax
import jax.numpy as jnp
from jax.experimental import pallas as pl
from jax.experimental.pallas import tpu as pltpu

HIDDEN = 32
OUT_DIM = 2


def _cdiv(a, b):
    return -(-a // b)


def _round_up(a, m):
    return _cdiv(a, m) * m


def _lstm_fc_kernel(seq_len, seq_pad,
                    x_ref, w_ih_ref, w_hh_ref, b_ref, w_fc_ref, b_fc_ref,
                    out_ref, gx_ref, h_ref, c_ref):
    """One (batch-tile, time-chunk) grid step of the LSTM + final FC.

    x_ref:    (1, TC, Bt, 1) f32  time-major batch tile for this time chunk
    w_ih_ref: (1, 4H)        f32  W_ih^T (input_size == 1)
    w_hh_ref: (H, 4H)        f32  W_hh^T
    b_ref:    (1, 4H)        f32  b_ih + b_hh
    w_fc_ref: (H, OUT)       f32  fc weight^T
    b_fc_ref: (1, OUT)       f32
    out_ref:  (Bt, OUT)      f32  written only on the last time chunk
    gx_ref:   (TC, Bt, 4H)   f32  scratch: hoisted input projection for this chunk
    h_ref:    (Bt, H)        f32  scratch: hidden state, carried across time chunks
    c_ref:    (Bt, H)        f32  scratch: cell state,  carried across time chunks
    """
    tc_steps, bt = x_ref.shape[1], x_ref.shape[2]
    H = w_hh_ref.shape[0]
    t_chunk = pl.program_id(1)

    # ---- reset recurrent state at the first time chunk of each batch tile ----
    @pl.when(t_chunk == 0)
    def _():
        h_ref[...] = jnp.zeros_like(h_ref)
        c_ref[...] = jnp.zeros_like(c_ref)

    # ---- hoisted input projection + bias for the whole chunk (one vectorized pass)
    x_tb1 = x_ref[0]                                              # (TC, Bt, 1)
    gx_ref[...] = x_tb1 * w_ih_ref[...][None] + b_ref[...][None]  # (TC, Bt, 4H)

    w_hh = w_hh_ref[...]                                          # hoisted out of the loop

    # Loop-invariant lane constants for the single-tanh gate activation:
    #   g lanes (cell candidate): act = tanh(gates)
    #   i/f/o lanes:              act = sigmoid(gates) = 0.5 * tanh(0.5 * gates) + 0.5
    lane = jax.lax.broadcasted_iota(jnp.int32, (bt, 4 * H), 1)
    is_g = (lane >= 2 * H) & (lane < 3 * H)
    gate_scale = jnp.where(is_g, 1.0, 0.5).astype(jnp.float32)    # pre- AND post-scale
    gate_shift = jnp.where(is_g, 0.0, 0.5).astype(jnp.float32)

    t_base = t_chunk * tc_steps
    pad_mask_needed = seq_pad != seq_len     # python bool: only true if T was padded

    def step(t, carry):
        h, c = carry
        # Only the recurrent matmul + one tanh sit on the serial critical path.
        gates = gx_ref[t] + jnp.dot(h, w_hh, preferred_element_type=jnp.float32)
        th = jnp.tanh(gates * gate_scale)          # single EUP pass over the whole tile
        act = th * gate_scale + gate_shift         # VPU fix-up of the i/f/o lanes
        i_g = act[:, 0:H]
        f_g = act[:, H:2 * H]
        g_g = act[:, 2 * H:3 * H]
        o_g = act[:, 3 * H:4 * H]
        c_new = f_g * c + i_g * g_g
        h_new = o_g * jnp.tanh(c_new)
        if pad_mask_needed:
            # Freeze the state on zero-padded timesteps of the (padded) last chunk.
            valid = (t_base + t) < seq_len
            h_new = jnp.where(valid, h_new, h)
            c_new = jnp.where(valid, c_new, c)
        return h_new, c_new

    # Unroll capped at 8: cross-iteration scheduling visibility without spilling the
    # 64-vreg file (each step touches ~16 vregs of gates at Bt=128).
    # TODO(synk): keep W_hh resident in MXU weight registers across the loop
    # (pltpu.matmul_push_rhs / matmul_acc_lhs / matmul_pop) once profiling justifies it.
    h_last, c_last = jax.lax.fori_loop(
        0, tc_steps, step, (h_ref[...], c_ref[...]), unroll=min(8, tc_steps))
    h_ref[...] = h_last
    c_ref[...] = c_last

    # ---- final FC only once, after the last time chunk ----
    # (The (Bt, 2) store is a masked 2-lane vst; negligible at one store per batch tile.)
    @pl.when(t_chunk == pl.num_programs(1) - 1)
    def _():
        out_ref[...] = (
            jnp.dot(h_last, w_fc_ref[...], preferred_element_type=jnp.float32)
            + b_fc_ref[...]
        )


def lstm_model_forward(x, params, *, max_batch_tile=128, max_time_chunk=128,
                       min_batch_tiles=1):
    """x: (B, T, 1) f32 -> (B, 2) f32   (== fc(h_n[-1]) of the PyTorch module).

    max_batch_tile:  batch rows per program (128 keeps the MXU/EUP tiles full).
    max_time_chunk:  timesteps whose hoisted input projection is held in VMEM at once;
                     longer sequences are streamed over an 'arbitrary' grid axis with
                     h/c carried in VMEM scratch (bounds peak VMEM to ~25 MiB).
    min_batch_tiles: set to 2 on v7x so both TensorCores get a batch tile even when a
                     single tile would hold the whole padded batch.
    """
    B, T, I = x.shape
    assert I == 1, "module has input_size=1"
    assert max_batch_tile % 8 == 0 and max_time_chunk % 8 == 0
    H = HIDDEN
    w_ih, w_hh, b_ih, b_hh, w_fc, b_fc = params

    # ---- batch tiling: sublane-aligned tiles over a 'parallel' grid axis ----
    B8 = _round_up(B, 8)
    b_tile = min(max_batch_tile, B8)
    if min_batch_tiles > 1:                      # v7x: give each TensorCore a tile
        b_tile = min(b_tile, max(8, _round_up(_cdiv(B8, min_batch_tiles), 8)))
    nb = _cdiv(B8, b_tile)
    B_pad = nb * b_tile

    # ---- time chunking: stream long sequences instead of holding all of T in VMEM ----
    if T <= max_time_chunk:
        tc, nt, T_pad = T, 1, T
    else:
        tc = max_time_chunk
        nt = _cdiv(T, tc)
        T_pad = nt * tc

    # (nb, T_pad, b_tile, 1): time-major per tile so each chunk's hoisted-projection
    # scratch is filled in one pass and the per-step read is a cheap leading-dim index.
    x2d = x[..., 0].astype(jnp.float32)                                   # (B, T)
    x2d = jnp.pad(x2d, ((0, B_pad - B), (0, T_pad - T)))
    x_tiles = x2d.reshape(nb, b_tile, T_pad).transpose(0, 2, 1)[..., None]

    w_ih_t = w_ih.reshape(4 * H, 1).T.astype(jnp.float32)                 # (1, 4H)
    w_hh_t = w_hh.T.astype(jnp.float32)                                   # (H, 4H)
    b_sum = (b_ih + b_hh).reshape(1, -1).astype(jnp.float32)              # (1, 4H)
    w_fc_t = w_fc.T.astype(jnp.float32)                                   # (H, OUT)
    b_fc_r = b_fc.reshape(1, -1).astype(jnp.float32)                      # (1, OUT)

    # Explicit VMEM budget (per program): double-buffered x block (lane-padded),
    # gx scratch, h/c state, weights, output.  Clamped under v7x's 64 MiB physical.
    x_blk_bytes = 2 * tc * b_tile * 128 * 4
    gx_bytes = tc * b_tile * 4 * H * 4
    state_bytes = 2 * b_tile * 128 * 4
    w_bytes = 2 * (4 * H + H * 4 * H + 4 * H + H * 128 + 128) * 4
    out_bytes = 2 * b_tile * 128 * 4
    vmem_needed = x_blk_bytes + gx_bytes + state_bytes + w_bytes + out_bytes
    vmem_limit = int(min(max(vmem_needed * 3 // 2 + (2 << 20), 16 << 20), 56 << 20))

    kernel = functools.partial(_lstm_fc_kernel, T, T_pad)

    out_pad = pl.pallas_call(
        kernel,
        out_shape=jax.ShapeDtypeStruct((B_pad, OUT_DIM), jnp.float32),
        grid_spec=pltpu.PrefetchScalarGridSpec(
            num_scalar_prefetch=0,
            grid=(nb, nt),
            in_specs=[
                pl.BlockSpec((1, tc, b_tile, 1), lambda i, t: (i, t, 0, 0)),
                pl.BlockSpec((1, 4 * H), lambda i, t: (0, 0)),
                pl.BlockSpec((H, 4 * H), lambda i, t: (0, 0)),
                pl.BlockSpec((1, 4 * H), lambda i, t: (0, 0)),
                pl.BlockSpec((H, OUT_DIM), lambda i, t: (0, 0)),
                pl.BlockSpec((1, OUT_DIM), lambda i, t: (0, 0)),
            ],
            out_specs=pl.BlockSpec((b_tile, OUT_DIM), lambda i, t: (i, 0)),
            scratch_shapes=[
                # TODO(synk): store gx (and W_hh) in bf16 on v6e/v7x to halve VMEM and
                # vld traffic; kept f32 so the same kernel is exact on v5e (no bf16 VPU).
                pltpu.VMEM((tc, b_tile, 4 * H), jnp.float32),
                pltpu.VMEM((b_tile, H), jnp.float32),
                pltpu.VMEM((b_tile, H), jnp.float32),
            ],
        ),
        compiler_params=pltpu.CompilerParams(
            dimension_semantics=("parallel", "arbitrary"),
            vmem_limit_bytes=vmem_limit,
        ),
    )(x_tiles, w_ih_t, w_hh_t, b_sum, w_fc_t, b_fc_r)
    return out_pad[:B]


def init_params(key):
    """Deterministic init matching PyTorch shapes (uniform(-1/sqrt(H), 1/sqrt(H)))."""
    H = HIDDEN
    bound = 1.0 / (H ** 0.5)
    ks = jax.random.split(key, 6)
    w_ih = jax.random.uniform(ks[0], (4 * H, 1), jnp.float32, -bound, bound)
    w_hh = jax.random.uniform(ks[1], (4 * H, H), jnp.float32, -bound, bound)
    b_ih = jax.random.uniform(ks[2], (4 * H,), jnp.float32, -bound, bound)
    b_hh = jax.random.uniform(ks[3], (4 * H,), jnp.float32, -bound, bound)
    w_fc = jax.random.uniform(ks[4], (OUT_DIM, H), jnp.float32, -bound, bound)
    b_fc = jax.random.uniform(ks[5], (OUT_DIM,), jnp.float32, -bound, bound)
    return (w_ih, w_hh, b_ih, b_hh, w_fc, b_fc)


def reference_forward(x, params):
    """Pure-JAX reference of the PyTorch forward, for correctness checking."""
    w_ih, w_hh, b_ih, b_hh, w_fc, b_fc = params
    B, T, _ = x.shape
    H = HIDDEN

    def cell(carry, x_t):
        h, c = carry
        gates = x_t @ w_ih.T + h @ w_hh.T + b_ih + b_hh
        i = jax.nn.sigmoid(gates[:, 0:H])
        f = jax.nn.sigmoid(gates[:, H:2 * H])
        g = jnp.tanh(gates[:, 2 * H:3 * H])
        o = jax.nn.sigmoid(gates[:, 3 * H:4 * H])
        c = f * c + i * g
        h = o * jnp.tanh(c)
        return (h, c), None

    h0 = jnp.zeros((B, H), jnp.float32)
    c0 = jnp.zeros((B, H), jnp.float32)
    (h_last, _), _ = jax.lax.scan(cell, (h0, c0), jnp.swapaxes(x, 0, 1))
    return h_last @ w_fc.T + b_fc


if __name__ == "__main__":
    key = jax.random.PRNGKey(0)
    k_x, k_p, k_x2 = jax.random.split(key, 3)

    params = init_params(k_p)

    # Small shapes consistent with the module (batch=2, seq=8, input_size=1).
    B, T = 2, 8
    x = jax.random.normal(k_x, (B, T, 1), jnp.float32)
    out = jax.block_until_ready(lstm_model_forward(x, params))
    ref = jax.block_until_ready(reference_forward(x, params))
    assert out.shape == (B, OUT_DIM)
    assert jnp.allclose(out, ref, atol=1e-4, rtol=1e-4), (out, ref)

    # Also exercise the batch-tiled + time-chunked (streamed) path with time padding.
    B2, T2 = 10, 20
    x2 = jax.random.normal(k_x2, (B2, T2, 1), jnp.float32)
    out2 = jax.block_until_ready(
        lstm_model_forward(x2, params, max_batch_tile=8, max_time_chunk=8))
    ref2 = jax.block_until_ready(reference_forward(x2, params))
    assert out2.shape == (B2, OUT_DIM)
    assert jnp.allclose(out2, ref2, atol=1e-4, rtol=1e-4), (out2, ref2)

    print("KERNEL_OK")
</pallas_src>

<mosaic_0001>
module attributes {stable_mosaic.version = 11 : i64} {
  func.func @_lstm_fc_kernel(%arg0: i32, %arg1: i32, %arg2: memref<1x8x8x1xf32, #tpu.memory_space<vmem>>, %arg3: memref<1x128xf32, #tpu.memory_space<vmem>>, %arg4: memref<32x128xf32, #tpu.memory_space<vmem>>, %arg5: memref<1x128xf32, #tpu.memory_space<vmem>>, %arg6: memref<32x2xf32, #tpu.memory_space<vmem>>, %arg7: memref<1x2xf32, #tpu.memory_space<vmem>>, %arg8: memref<8x2xf32, #tpu.memory_space<vmem>>, %arg9: memref<8x8x128xf32, #tpu.memory_space<vmem>>, %arg10: memref<8x32xf32, #tpu.memory_space<vmem>>, %arg11: memref<8x32xf32, #tpu.memory_space<vmem>>) attributes {dimension_semantics = [#tpu.dimension_semantics<parallel>, #tpu.dimension_semantics<arbitrary>], iteration_bounds = array<i64: 1, 1>, scalar_prefetch = 0 : i64, scratch_operands = 3 : i64, tpu.core_type = #tpu.core_type<tc>, window_params = [{transform_indices = @transform_0, window_bounds = array<i64: 1, 8, 8, 1>}, {pipeline_mode = #tpu.pipeline_mode<synchronous>, transform_indices = @transform_1, window_bounds = array<i64: 1, 128>}, {pipeline_mode = #tpu.pipeline_mode<synchronous>, transform_indices = @transform_2, window_bounds = array<i64: 32, 128>}, {pipeline_mode = #tpu.pipeline_mode<synchronous>, transform_indices = @transform_3, window_bounds = array<i64: 1, 128>}, {pipeline_mode = #tpu.pipeline_mode<synchronous>, transform_indices = @transform_4, window_bounds = array<i64: 32, 2>}, {pipeline_mode = #tpu.pipeline_mode<synchronous>, transform_indices = @transform_5, window_bounds = array<i64: 1, 2>}, {transform_indices = @transform_6, window_bounds = array<i64: 8, 2>}]} {
    %c0_i32 = arith.constant 0 : i32
    %0 = arith.cmpi eq, %arg1, %c0_i32 : i32
    %1 = arith.extui %0 : i1 to i32
    %c0_i32_0 = arith.constant 0 : i32
    %2 = arith.cmpi ne, %1, %c0_i32_0 : i32
    scf.if %2 {
      %cst_51 = arith.constant 0.000000e+00 : f32
      %179 = vector.broadcast %cst_51 : f32 to vector<8x32xf32>
      %c0_52 = arith.constant 0 : index
      %c0_53 = arith.constant 0 : index
      %180 = vector.load %arg10[%c0_52, %c0_53] : memref<8x32xf32, #tpu.memory_space<vmem>>, vector<8x32xf32>
      tpu.vector_store %arg10[%c0_52, %c0_53], %179 {strides = array<i32>} : memref<8x32xf32, #tpu.memory_space<vmem>>, vector<8x32xf32>,
      %cst_54 = arith.constant 0.000000e+00 : f32
      %181 = vector.broadcast %cst_54 : f32 to vector<8x32xf32>
      %c0_55 = arith.constant 0 : index
      %c0_56 = arith.constant 0 : index
      %182 = vector.load %arg11[%c0_55, %c0_56] : memref<8x32xf32, #tpu.memory_space<vmem>>, vector<8x32xf32>
      tpu.vector_store %arg11[%c0_55, %c0_56], %181 {strides = array<i32>} : memref<8x32xf32, #tpu.memory_space<vmem>>, vector<8x32xf32>,
    } else {
    }
    %c0 = arith.constant 0 : index
    %c0_1 = arith.constant 0 : index
    %c0_2 = arith.constant 0 : index
    %c0_3 = arith.constant 0 : index
    %3 = vector.load %arg2[%c0, %c0_1, %c0_2, %c0_3] : memref<1x8x8x1xf32, #tpu.memory_space<vmem>>, vector<1x8x8x1xf32>
    %4 = vector.shape_cast %3 : vector<1x8x8x1xf32> to vector<8x8x1xf32>
    %c0_4 = arith.constant 0 : index
    %c0_5 = arith.constant 0 : index
    %5 = vector.load %arg3[%c0_4, %c0_5] : memref<1x128xf32, #tpu.memory_space<vmem>>, vector<1x128xf32>
    %6 = vector.shape_cast %5 : vector<1x128xf32> to vector<1x1x128xf32>
    %7 = vector.broadcast %4 : vector<8x8x1xf32> to vector<8x8x128xf32>
    %8 = vector.broadcast %6 : vector<1x1x128xf32> to vector<8x8x128xf32>
    %9 = arith.mulf %7, %8 : vector<8x8x128xf32>
    %c0_6 = arith.constant 0 : index
    %c0_7 = arith.constant 0 : index
    %10 = vector.load %arg5[%c0_6, %c0_7] : memref<1x128xf32, #tpu.memory_space<vmem>>, vector<1x128xf32>
    %11 = vector.shape_cast %10 : vector<1x128xf32> to vector<1x1x128xf32>
    %12 = vector.broadcast %11 : vector<1x1x128xf32> to vector<8x8x128xf32>
    %13 = arith.addf %9, %12 : vector<8x8x128xf32>
    %c0_8 = arith.constant 0 : index
    %c0_9 = arith.constant 0 : index
    %c0_10 = arith.constant 0 : index
    %14 = vector.load %arg9[%c0_8, %c0_9, %c0_10] : memref<8x8x128xf32, #tpu.memory_space<vmem>>, vector<8x8x128xf32>
    tpu.vector_store %arg9[%c0_8, %c0_9, %c0_10], %13 {strides = array<i32>} : memref<8x8x128xf32, #tpu.memory_space<vmem>>, vector<8x8x128xf32>,
    %c0_11 = arith.constant 0 : index
    %c0_12 = arith.constant 0 : index
    %15 = vector.load %arg4[%c0_11, %c0_12] : memref<32x128xf32, #tpu.memory_space<vmem>>, vector<32x128xf32>
    %16 = tpu.iota {dimensions = array<i32: 1>} : vector<8x128xi32>
    %c64_i32 = arith.constant 64 : i32
    %17 = vector.broadcast %c64_i32 : i32 to vector<8x128xi32>
    %18 = arith.cmpi sge, %16, %17 : vector<8x128xi32>
    %c96_i32 = arith.constant 96 : i32
    %19 = vector.broadcast %c96_i32 : i32 to vector<8x128xi32>
    %20 = arith.cmpi slt, %16, %19 : vector<8x128xi32>
    %21 = arith.andi %18, %20 : vector<8x128xi1>
    %cst = arith.constant 1.000000e+00 : f32
    %cst_13 = arith.constant 5.000000e-01 : f32
    %22 = vector.broadcast %cst : f32 to vector<8x128xf32>
    %23 = vector.broadcast %cst_13 : f32 to vector<8x128xf32>
    %24 = arith.select %21, %22, %23 : vector<8x128xi1>, vector<8x128xf32>
    %cst_14 = arith.constant 0.000000e+00 : f32
    %cst_15 = arith.constant 5.000000e-01 : f32
    %25 = vector.broadcast %cst_14 : f32 to vector<8x128xf32>
    %26 = vector.broadcast %cst_15 : f32 to vector<8x128xf32>
    %27 = arith.select %21, %25, %26 : vector<8x128xi1>, vector<8x128xf32>
    %c0_16 = arith.constant 0 : index
    %c0_17 = arith.constant 0 : index
    %28 = vector.load %arg10[%c0_16, %c0_17] : memref<8x32xf32, #tpu.memory_space<vmem>>, vector<8x32xf32>
    %c0_18 = arith.constant 0 : index
    %c0_19 = arith.constant 0 : index
    %29 = vector.load %arg11[%c0_18, %c0_19] : memref<8x32xf32, #tpu.memory_space<vmem>>, vector<8x32xf32>
    %c0_i32_20 = arith.constant 0 : i32
    %30 = arith.index_cast %c0_i32_20 : i32 to index
    %c0_21 = arith.constant 0 : index
    %c0_22 = arith.constant 0 : index
    %31 = vector.load %arg9[%30, %c0_21, %c0_22] : memref<8x8x128xf32, #tpu.memory_space<vmem>>, vector<1x8x128xf32>
    %32 = vector.shape_cast %31 : vector<1x8x128xf32> to vector<8x128xf32>
    %cst_23 = arith.constant dense<0.000000e+00> : vector<8x128xf32>
    %33 = tpu.matmul %28, %15, %cst_23 {dimension_numbers = #tpu.dot_dimension_numbers<[1], [0], [0], [1], [0, 0, 1, 1], [], []>} : vector<8x32xf32>, vector<32x128xf32>, vector<8x128xf32> -> vector<8x128xf32>
    %34 = arith.addf %32, %33 : vector<8x128xf32>
    %35 = arith.mulf %34, %24 : vector<8x128xf32>
    %36 = math.tanh %35 : vector<8x128xf32>
    %37 = arith.mulf %36, %24 : vector<8x128xf32>
    %38 = arith.addf %37, %27 : vector<8x128xf32>
    %39 = vector.extract_strided_slice %38 {offsets = [0, 0], sizes = [8, 32], strides = [1, 1]} : vector<8x128xf32> to vector<8x32xf32>
    %40 = vector.extract_strided_slice %38 {offsets = [0, 32], sizes = [8, 32], strides = [1, 1]} : vector<8x128xf32> to vector<8x32xf32>
    %41 = vector.extract_strided_slice %38 {offsets = [0, 64], sizes = [8, 32], strides = [1, 1]} : vector<8x128xf32> to vector<8x32xf32>
    %42 = vector.extract_strided_slice %38 {offsets = [0, 96], sizes = [8, 32], strides = [1, 1]} : vector<8x128xf32> to vector<8x32xf32>
    %43 = arith.mulf %40, %29 : vector<8x32xf32>
    %44 = arith.mulf %39, %41 : vector<8x32xf32>
    %45 = arith.addf %43, %44 : vector<8x32xf32>
    %46 = math.tanh %45 : vector<8x32xf32>
    %47 = arith.mulf %42, %46 : vector<8x32xf32>
    %c1_i32 = arith.constant 1 : i32
    %48 = arith.index_cast %c1_i32 : i32 to index
    %c0_24 = arith.constant 0 : index
    %c0_25 = arith.constant 0 : index
    %49 = vector.load %arg9[%48, %c0_24, %c0_25] : memref<8x8x128xf32, #tpu.memory_space<vmem>>, vector<1x8x128xf32>
    %50 = vector.shape_cast %49 : vector<1x8x128xf32> to vector<8x128xf32>
    %cst_26 = arith.constant dense<0.000000e+00> : vector<8x128xf32>
    %51 = tpu.matmul %47, %15, %cst_26 {dimension_numbers = #tpu.dot_dimension_numbers<[1], [0], [0], [1], [0, 0, 1, 1], [], []>} : vector<8x32xf32>, vector<32x128xf32>, vector<8x128xf32> -> vector<8x128xf32>
    %52 = arith.addf %50, %51 : vector<8x128xf32>
    %53 = arith.mulf %52, %24 : vector<8x128xf32>
    %54 = math.tanh %53 : vector<8x128xf32>
    %55 = arith.mulf %54, %24 : vector<8x128xf32>
    %56 = arith.addf %55, %27 : vector<8x128xf32>
    %57 = vector.extract_strided_slice %56 {offsets = [0, 0], sizes = [8, 32], strides = [1, 1]} : vector<8x128xf32> to vector<8x32xf32>
    %58 = vector.extract_strided_slice %56 {offsets = [0, 32], sizes = [8, 32], strides = [1, 1]} : vector<8x128xf32> to vector<8x32xf32>
    %59 = vector.extract_strided_slice %56 {offsets = [0, 64], sizes = [8, 32], strides = [1, 1]} : vector<8x128xf32> to vector<8x32xf32>
    %60 = vector.extract_strided_slice %56 {offsets = [0, 96], sizes = [8, 32], strides = [1, 1]} : vector<8x128xf32> to vector<8x32xf32>
    %61 = arith.mulf %58, %45 : vector<8x32xf32>
    %62 = arith.mulf %57, %59 : vector<8x32xf32>
    %63 = arith.addf %61, %62 : vector<8x32xf32>
    %64 = math.tanh %63 : vector<8x32xf32>
    %65 = arith.mulf %60, %64 : vector<8x32xf32>
    %c2_i32 = arith.constant 2 : i32
    %66 = arith.index_cast %c2_i32 : i32 to index
    %c0_27 = arith.constant 0 : index
    %c0_28 = arith.constant 0 : index
    %67 = vector.load %arg9[%66, %c0_27, %c0_28] : memref<8x8x128xf32, #tpu.memory_space<vmem>>, vector<1x8x128xf32>
    %68 = vector.shape_cast %67 : vector<1x8x128xf32> to vector<8x128xf32>
    %cst_29 = arith.constant dense<0.000000e+00> : vector<8x128xf32>
    %69 = tpu.matmul %65, %15, %cst_29 {dimension_numbers = #tpu.dot_dimension_numbers<[1], [0], [0], [1], [0, 0, 1, 1], [], []>} : vector<8x32xf32>, vector<32x128xf32>, vector<8x128xf32> -> vector<8x128xf32>
    %70 = arith.addf %68, %69 : vector<8x128xf32>
    %71 = arith.mulf %70, %24 : vector<8x128xf32>
    %72 = math.tanh %71 : vector<8x128xf32>
    %73 = arith.mulf %72, %24 : vector<8x128xf32>
    %74 = arith.addf %73, %27 : vector<8x128xf32>
    %75 = vector.extract_strided_slice %74 {offsets = [0, 0], sizes = [8, 32], strides = [1, 1]} : vector<8x128xf32> to vector<8x32xf32>
    %76 = vector.extract_strided_slice %74 {offsets = [0, 32], sizes = [8, 32], strides = [1, 1]} : vector<8x128xf32> to vector<8x32xf32>
    %77 = vector.extract_strided_slice %74 {offsets = [0, 64], sizes = [8, 32], strides = [1, 1]} : vector<8x128xf32> to vector<8x32xf32>
    %78 = vector.extract_strided_slice %74 {offsets = [0, 96], sizes = [8, 32], strides = [1, 1]} : vector<8x128xf32> to vector<8x32xf32>
    %79 = arith.mulf %76, %63 : vector<8x32xf32>
    %80 = arith.mulf %75, %77 : vector<8x32xf32>
    %81 = arith.addf %79, %80 : vector<8x32xf32>
    %82 = math.tanh %81 : vector<8x32xf32>
    %83 = arith.mulf %78, %82 : vector<8x32xf32>
    %c3_i32 = arith.constant 3 : i32
    %84 = arith.index_cast %c3_i32 : i32 to index
    %c0_30 = arith.constant 0 : index
    %c0_31 = arith.constant 0 : index
    %85 = vector.load %arg9[%84, %c0_30, %c0_31] : memref<8x8x128xf32, #tpu.memory_space<vmem>>, vector<1x8x128xf32>
    %86 = vector.shape_cast %85 : vector<1x8x128xf32> to vector<8x128xf32>
    %cst_32 = arith.constant dense<0.000000e+00> : vector<8x128xf32>
    %87 = tpu.matmul %83, %15, %cst_32 {dimension_numbers = #tpu.dot_dimension_numbers<[1], [0], [0], [1], [0, 0, 1, 1], [], []>} : vector<8x32xf32>, vector<32x128xf32>, vector<8x128xf32> -> vector<8x128xf32>
    %88 = arith.addf %86, %87 : vector<8x128xf32>
    %89 = arith.mulf %88, %24 : vector<8x128xf32>
    %90 = math.tanh %89 : vector<8x128xf32>
    %91 = arith.mulf %90, %24 : vector<8x128xf32>
    %92 = arith.addf %91, %27 : vector<8x128xf32>
    %93 = vector.extract_strided_slice %92 {offsets = [0, 0], sizes = [8, 32], strides = [1, 1]} : vector<8x128xf32> to vector<8x32xf32>
    %94 = vector.extract_strided_slice %92 {offsets = [0, 32], sizes = [8, 32], strides = [1, 1]} : vector<8x128xf32> to vector<8x32xf32>
    %95 = vector.extract_strided_slice %92 {offsets = [0, 64], sizes = [8, 32], strides = [1, 1]} : vector<8x128xf32> to vector<8x32xf32>
    %96 = vector.extract_strided_slice %92 {offsets = [0, 96], sizes = [8, 32], strides = [1, 1]} : vector<8x128xf32> to vector<8x32xf32>
    %97 = arith.mulf %94, %81 : vector<8x32xf32>
    %98 = arith.mulf %93, %95 : vector<8x32xf32>
    %99 = arith.addf %97, %98 : vector<8x32xf32>
    %100 = math.tanh %99 : vector<8x32xf32>
    %101 = arith.mulf %96, %100 : vector<8x32xf32>
    %c4_i32 = arith.constant 4 : i32
    %102 = arith.index_cast %c4_i32 : i32 to index
    %c0_33 = arith.constant 0 : index
    %c0_34 = arith.constant 0 : index
    %103 = vector.load %arg9[%102, %c0_33, %c0_34] : memref<8x8x128xf32, #tpu.memory_space<vmem>>, vector<1x8x128xf32>
    %104 = vector.shape_cast %103 : vector<1x8x128xf32> to vector<8x128xf32>
    %cst_35 = arith.constant dense<0.000000e+00> : vector<8x128xf32>
    %105 = tpu.matmul %101, %15, %cst_35 {dimension_numbers = #tpu.dot_dimension_numbers<[1], [0], [0], [1], [0, 0, 1, 1], [], []>} : vector<8x32xf32>, vector<32x128xf32>, vector<8x128xf32> -> vector<8x128xf32>
    %106 = arith.addf %104, %105 : vector<8x128xf32>
    %107 = arith.mulf %106, %24 : vector<8x128xf32>
    %108 = math.tanh %107 : vector<8x128xf32>
    %109 = arith.mulf %108, %24 : vector<8x128xf32>
    %110 = arith.addf %109, %27 : vector<8x128xf32>
    %111 = vector.extract_strided_slice %110 {offsets = [0, 0], sizes = [8, 32], strides = [1, 1]} : vector<8x128xf32> to vector<8x32xf32>
    %112 = vector.extract_strided_slice %110 {offsets = [0, 32], sizes = [8, 32], strides = [1, 1]} : vector<8x128xf32> to vector<8x32xf32>
    %113 = vector.extract_strided_slice %110 {offsets = [0, 64], sizes = [8, 32], strides = [1, 1]} : vector<8x128xf32> to vector<8x32xf32>
    %114 = vector.extract_strided_slice %110 {offsets = [0, 96], sizes = [8, 32], strides = [1, 1]} : vector<8x128xf32> to vector<8x32xf32>
    %115 = arith.mulf %112, %99 : vector<8x32xf32>
    %116 = arith.mulf %111, %113 : vector<8x32xf32>
    %117 = arith.addf %115, %116 : vector<8x32xf32>
    %118 = math.tanh %117 : vector<8x32xf32>
    %119 = arith.mulf %114, %118 : vector<8x32xf32>
    %c5_i32 = arith.constant 5 : i32
    %120 = arith.index_cast %c5_i32 : i32 to index
    %c0_36 = arith.constant 0 : index
    %c0_37 = arith.constant 0 : index
    %121 = vector.load %arg9[%120, %c0_36, %c0_37] : memref<8x8x128xf32, #tpu.memory_space<vmem>>, vector<1x8x128xf32>
    %122 = vector.shape_cast %121 : vector<1x8x128xf32> to vector<8x128xf32>
    %cst_38 = arith.constant dense<0.000000e+00> : vector<8x128xf32>
    %123 = tpu.matmul %119, %15, %cst_38 {dimension_numbers = #tpu.dot_dimension_numbers<[1], [0], [0], [1], [0, 0, 1, 1], [], []>} : vector<8x32xf32>, vector<32x128xf32>, vector<8x128xf32> -> vector<8x128xf32>
    %124 = arith.addf %122, %123 : vector<8x128xf32>
    %125 = arith.mulf %124, %24 : vector<8x128xf32>
    %126 = math.tanh %125 : vector<8x128xf32>
    %127 = arith.mulf %126, %24 : vector<8x128xf32>
    %128 = arith.addf %127, %27 : vector<8x128xf32>
    %129 = vector.extract_strided_slice %128 {offsets = [0, 0], sizes = [8, 32], strides = [1, 1]} : vector<8x128xf32> to vector<8x32xf32>
    %130 = vector.extract_strided_slice %128 {offsets = [0, 32], sizes = [8, 32], strides = [1, 1]} : vector<8x128xf32> to vector<8x32xf32>
    %131 = vector.extract_strided_slice %128 {offsets = [0, 64], sizes = [8, 32], strides = [1, 1]} : vector<8x128xf32> to vector<8x32xf32>
    %132 = vector.extract_strided_slice %128 {offsets = [0, 96], sizes = [8, 32], strides = [1, 1]} : vector<8x128xf32> to vector<8x32xf32>
    %133 = arith.mulf %130, %117 : vector<8x32xf32>
    %134 = arith.mulf %129, %131 : vector<8x32xf32>
    %135 = arith.addf %133, %134 : vector<8x32xf32>
    %136 = math.tanh %135 : vector<8x32xf32>
    %137 = arith.mulf %132, %136 : vector<8x32xf32>
    %c6_i32 = arith.constant 6 : i32
    %138 = arith.index_cast %c6_i32 : i32 to index
    %c0_39 = arith.constant 0 : index
    %c0_40 = arith.constant 0 : index
    %139 = vector.load %arg9[%138, %c0_39, %c0_40] : memref<8x8x128xf32, #tpu.memory_space<vmem>>, vector<1x8x128xf32>
    %140 = vector.shape_cast %139 : vector<1x8x128xf32> to vector<8x128xf32>
    %cst_41 = arith.constant dense<0.000000e+00> : vector<8x128xf32>
    %141 = tpu.matmul %137, %15, %cst_41 {dimension_numbers = #tpu.dot_dimension_numbers<[1], [0], [0], [1], [0, 0, 1, 1], [], []>} : vector<8x32xf32>, vector<32x128xf32>, vector<8x128xf32> -> vector<8x128xf32>
    %142 = arith.addf %140, %141 : vector<8x128xf32>
    %143 = arith.mulf %142, %24 : vector<8x128xf32>
    %144 = math.tanh %143 : vector<8x128xf32>
    %145 = arith.mulf %144, %24 : vector<8x128xf32>
    %146 = arith.addf %145, %27 : vector<8x128xf32>
    %147 = vector.extract_strided_slice %146 {offsets = [0, 0], sizes = [8, 32], strides = [1, 1]} : vector<8x128xf32> to vector<8x32xf32>
    %148 = vector.extract_strided_slice %146 {offsets = [0, 32], sizes = [8, 32], strides = [1, 1]} : vector<8x128xf32> to vector<8x32xf32>
    %149 = vector.extract_strided_slice %146 {offsets = [0, 64], sizes = [8, 32], strides = [1, 1]} : vector<8x128xf32> to vector<8x32xf32>
    %150 = vector.extract_strided_slice %146 {offsets = [0, 96], sizes = [8, 32], strides = [1, 1]} : vector<8x128xf32> to vector<8x32xf32>
    %151 = arith.mulf %148, %135 : vector<8x32xf32>
    %152 = arith.mulf %147, %149 : vector<8x32xf32>
    %153 = arith.addf %151, %152 : vector<8x32xf32>
    %154 = math.tanh %153 : vector<8x32xf32>
    %155 = arith.mulf %150, %154 : vector<8x32xf32>
    %c7_i32 = arith.constant 7 : i32
    %156 = arith.index_cast %c7_i32 : i32 to index
    %c0_42 = arith.constant 0 : index
    %c0_43 = arith.constant 0 : index
    %157 = vector.load %arg9[%156, %c0_42, %c0_43] : memref<8x8x128xf32, #tpu.memory_space<vmem>>, vector<1x8x128xf32>
    %158 = vector.shape_cast %157 : vector<1x8x128xf32> to vector<8x128xf32>
    %cst_44 = arith.constant dense<0.000000e+00> : vector<8x128xf32>
    %159 = tpu.matmul %155, %15, %cst_44 {dimension_numbers = #tpu.dot_dimension_numbers<[1], [0], [0], [1], [0, 0, 1, 1], [], []>} : vector<8x32xf32>, vector<32x128xf32>, vector<8x128xf32> -> vector<8x128xf32>
    %160 = arith.addf %158, %159 : vector<8x128xf32>
    %161 = arith.mulf %160, %24 : vector<8x128xf32>
    %162 = math.tanh %161 : vector<8x128xf32>
    %163 = arith.mulf %162, %24 : vector<8x128xf32>
    %164 = arith.addf %163, %27 : vector<8x128xf32>
    %165 = vector.extract_strided_slice %164 {offsets = [0, 0], sizes = [8, 32], strides = [1, 1]} : vector<8x128xf32> to vector<8x32xf32>
    %166 = vector.extract_strided_slice %164 {offsets = [0, 32], sizes = [8, 32], strides = [1, 1]} : vector<8x128xf32> to vector<8x32xf32>
    %167 = vector.extract_strided_slice %164 {offsets = [0, 64], sizes = [8, 32], strides = [1, 1]} : vector<8x128xf32> to vector<8x32xf32>
    %168 = vector.extract_strided_slice %164 {offsets = [0, 96], sizes = [8, 32], strides = [1, 1]} : vector<8x128xf32> to vector<8x32xf32>
    %169 = arith.mulf %166, %153 : vector<8x32xf32>
    %170 = arith.mulf %165, %167 : vector<8x32xf32>
    %171 = arith.addf %169, %170 : vector<8x32xf32>
    %172 = math.tanh %171 : vector<8x32xf32>
    %173 = arith.mulf %168, %172 : vector<8x32xf32>
    %c8_i32 = arith.constant 8 : i32
    %c0_45 = arith.constant 0 : index
    %c0_46 = arith.constant 0 : index
    %174 = vector.load %arg10[%c0_45, %c0_46] : memref<8x32xf32, #tpu.memory_space<vmem>>, vector<8x32xf32>
    tpu.vector_store %arg10[%c0_45, %c0_46], %173 {strides = array<i32>} : memref<8x32xf32, #tpu.memory_space<vmem>>, vector<8x32xf32>,
    %c0_47 = arith.constant 0 : index
    %c0_48 = arith.constant 0 : index
    %175 = vector.load %arg11[%c0_47, %c0_48] : memref<8x32xf32, #tpu.memory_space<vmem>>, vector<8x32xf32>
    tpu.vector_store %arg11[%c0_47, %c0_48], %171 {strides = array<i32>} : memref<8x32xf32, #tpu.memory_space<vmem>>, vector<8x32xf32>,
    %c0_i32_49 = arith.constant 0 : i32
    %176 = arith.cmpi eq, %arg1, %c0_i32_49 : i32
    %177 = arith.extui %176 : i1 to i32
    %c0_i32_50 = arith.constant 0 : i32
    %178 = arith.cmpi ne, %177, %c0_i32_50 : i32
    scf.if %178 {
      %c0_51 = arith.constant 0 : index
      %c0_52 = arith.constant 0 : index
      %179 = vector.load %arg6[%c0_51, %c0_52] : memref<32x2xf32, #tpu.memory_space<vmem>>, vector<32x2xf32>
      %cst_53 = arith.constant dense<0.000000e+00> : vector<8x2xf32>
      %180 = tpu.matmul %173, %179, %cst_53 {dimension_numbers = #tpu.dot_dimension_numbers<[1], [0], [0], [1], [0, 0, 1, 1], [], []>} : vector<8x32xf32>, vector<32x2xf32>, vector<8x2xf32> -> vector<8x2xf32>
      %c0_54 = arith.constant 0 : index
      %c0_55 = arith.constant 0 : index
      %181 = vector.load %arg7[%c0_54, %c0_55] : memref<1x2xf32, #tpu.memory_space<vmem>>, vector<1x2xf32>
      %182 = vector.broadcast %181 : vector<1x2xf32> to vector<8x2xf32>
      %183 = arith.addf %180, %182 : vector<8x2xf32>
      %c0_56 = arith.constant 0 : index
      %c0_57 = arith.constant 0 : index
      %184 = vector.load %arg8[%c0_56, %c0_57] : memref<8x2xf32, #tpu.memory_space<vmem>>, vector<8x2xf32>
      tpu.vector_store %arg8[%c0_56, %c0_57], %183 {strides = array<i32>} : memref<8x2xf32, #tpu.memory_space<vmem>>, vector<8x2xf32>,
    } else {
    }
    return
  }
  func.func @transform_0(%arg0: i32, %arg1: i32) -> (i32, i32, i32, i32) {
    %c0_i32 = arith.constant 0 : i32
    %c0_i32_0 = arith.constant 0 : i32
    %c0_i32_1 = arith.constant 0 : i32
    return %arg0, %arg1, %c0_i32, %c0_i32_0 : i32, i32, i32, i32
  }
  func.func @transform_1(%arg0: i32, %arg1: i32) -> (i32, i32) {
    %c0_i32 = arith.constant 0 : i32
    %c0_i32_0 = arith.constant 0 : i32
    %c0_i32_1 = arith.constant 0 : i32
    return %c0_i32, %c0_i32_0 : i32, i32
  }
  func.func @transform_2(%arg0: i32, %arg1: i32) -> (i32, i32) {
    %c0_i32 = arith.constant 0 : i32
    %c0_i32_0 = arith.constant 0 : i32
    %c0_i32_1 = arith.constant 0 : i32
    return %c0_i32, %c0_i32_0 : i32, i32
  }
  func.func @transform_3(%arg0: i32, %arg1: i32) -> (i32, i32) {
    %c0_i32 = arith.constant 0 : i32
    %c0_i32_0 = arith.constant 0 : i32
    %c0_i32_1 = arith.constant 0 : i32
    return %c0_i32, %c0_i32_0 : i32, i32
  }
  func.func @transform_4(%arg0: i32, %arg1: i32) -> (i32, i32) {
    %c0_i32 = arith.constant 0 : i32
    %c0_i32_0 = arith.constant 0 : i32
    %c0_i32_1 = arith.constant 0 : i32
    return %c0_i32, %c0_i32_0 : i32, i32
  }
  func.func @transform_5(%arg0: i32, %arg1: i32) -> (i32, i32) {
    %c0_i32 = arith.constant 0 : i32
    %c0_i32_0 = arith.constant 0 : i32
    %c0_i32_1 = arith.constant 0 : i32
    return %c0_i32, %c0_i32_0 : i32, i32
  }
  func.func @transform_6(%arg0: i32, %arg1: i32) -> (i32, i32) {
    %c0_i32 = arith.constant 0 : i32
    %c0_i32_0 = arith.constant 0 : i32
    return %arg0, %c0_i32 : i32, i32
  }
}

</mosaic_0001>

<llo_original>
// kernel: tpu_custom_call.1
$region0: #{tpu_custom_call.1}
  #allocation0 [shape = 'u32[]', space=smem, size = 0x4, offset = 0x4, fixed_abs, tag = 'smem constant byte address 0x4 - core index']
  #allocation1 [shape = 'u32[144,128]{1,0:T(1,128)}', space=vmem, size = 0x12000, scoped, tag = 'internal scratch']
  #allocation2 [shape = 'f32[8,8,128]{2,1,0:T(8,128)}', space=vmem, size = 0x8000, scoped, tag = 'scratch operand']
  #allocation3 [shape = 'f32[8,32]{1,0:T(8,128)}', space=vmem, size = 0x1000, scoped, tag = 'scratch operand']
  #allocation4 [shape = 'f32[8,32]{1,0:T(8,128)}', space=vmem, size = 0x1000, scoped, tag = 'scratch operand']
  %s0 = inlined_call_operand.vmem [shape: f32[1,8,8,1], index: 0, kind: input, shape index: {}]
  %s1 = inlined_call_operand.vmem [shape: f32[1,128], index: 1, kind: input, shape index: {}]
  %s2 = inlined_call_operand.vmem [shape: f32[32,128], index: 2, kind: input, shape index: {}]
  %s3 = inlined_call_operand.vmem [shape: f32[1,128], index: 3, kind: input, shape index: {}]
  %s4 = inlined_call_operand.vmem [shape: f32[32,2], index: 4, kind: input, shape index: {}]
  %s5 = inlined_call_operand.vmem [shape: f32[1,2], index: 5, kind: input, shape index: {}]
  %s6 = inlined_call_operand.vmem [shape: f32[8,2], index: 6, kind: output, shape index: {}]
  %s7 = sld [smem:[#allocation0]]
  $region42: #{tpu_custom_call.1} parent=0
    _
  %s9 = ssub.s32 1, %s7
  %s10 = scalar_select 0, %s9, %s7
  // Predicated region
  $region2: #{tpu_custom_call.1} parent=0 // pred_check
    _
  $region3: #{tpu_custom_call.1} parent=0 // pred_check_branch
    %12 = sbr.rel (0) target = $region5
  $region4: #{tpu_custom_call.1} parent=0 // pred_region
    _
  $region5: #{tpu_custom_call.1} parent=0 // pred_fallthru
    _
  // Predicated region
  $region6: #{tpu_custom_call.1} parent=0 // pred_check
    _
  $region7: #{tpu_custom_call.1} parent=0 // pred_check_branch
    %14 = sbr.rel (0) target = $region9
  $region8: #{tpu_custom_call.1} parent=0 // pred_region
    _
  $region9: #{tpu_custom_call.1} parent=0 // pred_fallthru
    _
  // Predicated region
  $region10: #{tpu_custom_call.1} parent=0 // pred_check
    _
  $region11: #{tpu_custom_call.1} parent=0 // pred_check_branch
    %16 = sbr.rel (0) target = $region13
  $region12: #{tpu_custom_call.1} parent=0 // pred_region
    _
  $region13: #{tpu_custom_call.1} parent=0 // pred_fallthru
    _
  // Predicated region
  $region14: #{tpu_custom_call.1} parent=0 // pred_check
    _
  $region15: #{tpu_custom_call.1} parent=0 // pred_check_branch
    %18 = sbr.rel (0) target = $region17
  $region16: #{tpu_custom_call.1} parent=0 // pred_region
    _
  $region17: #{tpu_custom_call.1} parent=0 // pred_fallthru
    _
  // Predicated region
  $region18: #{tpu_custom_call.1} parent=0 // pred_check
    _
  $region19: #{tpu_custom_call.1} parent=0 // pred_check_branch
    %20 = sbr.rel (0) target = $region21
  $region20: #{tpu_custom_call.1} parent=0 // pred_region
    _
  $region21: #{tpu_custom_call.1} parent=0 // pred_fallthru
    _
  // Predicated region
  $region22: #{tpu_custom_call.1} parent=0 // pred_check
    _
  $region23: #{tpu_custom_call.1} parent=0 // pred_check_branch
    %22 = sbr.rel (0) target = $region25
  $region24: #{tpu_custom_call.1} parent=0 // pred_region
    _
  $region25: #{tpu_custom_call.1} parent=0 // pred_fallthru
    _
  %p23 = scmp.eq.s32.totalorder 0, 0
  // Predicated region
  $region26: #{tpu_custom_call.1} parent=0 // pred_check
    %p24 = pneg %p23
  $region27: #{tpu_custom_call.1} parent=0 // pred_check_branch
    %26 = sbr.rel (%p24) target = $region29
  $region28: #{tpu_custom_call.1} parent=0 // pred_region
    %vm27 = vcmask 261120
    %28 = vst.msk [vmem:[#allocation3] sm:$0xff] %vm27, 0.0
    %29 = vst.msk [vmem:[#allocation4] sm:$0xff] %vm27, 0.0
  $region29: #{tpu_custom_call.1} parent=0 // pred_fallthru
    _
  %v30 = vld [vmem:[%s0] sm:$0xff]
  %v31 = vld [vmem:[%s0 + $0x8] sm:$0xff]
  %v32 = vld [vmem:[%s0 + $0x10] sm:$0xff]
  %v33 = vld [vmem:[%s0 + $0x18] sm:$0xff]
  %v34 = vld [vmem:[%s0 + $0x20] sm:$0xff]
  %v35 = vld [vmem:[%s0 + $0x28] sm:$0xff]
  %v36 = vld [vmem:[%s0 + $0x30] sm:$0xff]
  %v37 = vld [vmem:[%s0 + $0x38] sm:$0xff]
  %v38 = vld [vmem:[%s1] sm:$0x1]
  %40 = vset.pattern.permute.xlu0 0
  %41 = vperm.xlu0 %40, %v30
  %v42 = vpop.permute.xlu0 %41
  %45 = vset.pattern.permute.xlu0 0
  %46 = vperm.xlu0 %45, %v31
  %v47 = vpop.permute.xlu0 %46
  %50 = vset.pattern.permute.xlu0 0
  %51 = vperm.xlu0 %50, %v32
  %v52 = vpop.permute.xlu0 %51
  %55 = vset.pattern.permute.xlu0 0
  %56 = vperm.xlu0 %55, %v33
  %v57 = vpop.permute.xlu0 %56
  %60 = vset.pattern.permute.xlu0 0
  %61 = vperm.xlu0 %60, %v34
  %v62 = vpop.permute.xlu0 %61
  %65 = vset.pattern.permute.xlu0 0
  %66 = vperm.xlu0 %65, %v35
  %v67 = vpop.permute.xlu0 %66
  %70 = vset.pattern.permute.xlu0 0
  %71 = vperm.xlu0 %70, %v36
  %v72 = vpop.permute.xlu0 %71
  %75 = vset.pattern.permute.xlu0 0
  %76 = vperm.xlu0 %75, %v37
  %v77 = vpop.permute.xlu0 %76
  %v80 = vlaneseq
  %v81 = vshrl.u32 %v80, 7
  %v82 = vsub.s32 0, %v81
  %v83 = vrot.slane %v38, %v82
  %v85 = vmul.f32 %v42, %v83
  %v86 = vmul.f32 %v47, %v83
  %v87 = vmul.f32 %v52, %v83
  %v88 = vmul.f32 %v57, %v83
  %v89 = vmul.f32 %v62, %v83
  %v90 = vmul.f32 %v67, %v83
  %v91 = vmul.f32 %v72, %v83
  %v92 = vmul.f32 %v77, %v83
  %v93 = vld [vmem:[%s3] sm:$0x1]
  %v95 = vlaneseq
  %v96 = vshrl.u32 %v95, 7
  %v97 = vsub.s32 0, %v96
  %v98 = vrot.slane %v93, %v97
  %v100 = vadd.f32 %v85, %v98
  %v101 = vadd.f32 %v86, %v98
  %v102 = vadd.f32 %v87, %v98
  %v103 = vadd.f32 %v88, %v98
  %v104 = vadd.f32 %v89, %v98
  %v105 = vadd.f32 %v90, %v98
  %v106 = vadd.f32 %v91, %v98
  %v107 = vadd.f32 %v92, %v98
  %108 = vst [vmem:[#allocation2] sm:$0xff] %v100
  %109 = vst [vmem:[#allocation2 + $0x8] sm:$0xff] %v101
  %110 = vst [vmem:[#allocation2 + $0x10] sm:$0xff] %v102
  %111 = vst [vmem:[#allocation2 + $0x18] sm:$0xff] %v103
  %112 = vst [vmem:[#allocation2 + $0x20] sm:$0xff] %v104
  %113 = vst [vmem:[#allocation2 + $0x28] sm:$0xff] %v105
  %114 = vst [vmem:[#allocation2 + $0x30] sm:$0xff] %v106
  %115 = vst [vmem:[#allocation2 + $0x38] sm:$0xff] %v107
  %v116 = vld [vmem:[%s2] sm:$0xff]
  %v117 = vld [vmem:[%s2 + $0x8] sm:$0xff]
  %v118 = vld [vmem:[%s2 + $0x10] sm:$0xff]
  %v119 = vld [vmem:[%s2 + $0x18] sm:$0xff]
  %v120 = vlaneseq
  %v121 = vand.u32 %v120, 127
  %vm122 = vcmp.ge.s32.totalorder %v121, 64
  %vm123 = vcmp.lt.s32.totalorder %v121, 96
  %vm124 = vmand %vm122, %vm123
  %v125 = vsel %vm124, 1.0, 0.5
  %v126 = vsel %vm124, 0.0, 0.5
  %v127 = vld [vmem:[#allocation3] sm:$0xff]
  %v128 = vld [vmem:[#allocation4] sm:$0xff]
  %v129 = vld [vmem:[#allocation2] sm:$0xff]
  %vm130 = vcmask 261120
  %v132 = vsel %vm130, %v127, 0
  %134 = vmatprep.subr.mxu0 0.0
  %135 = vmatpush1.msra.mxu0 %v116
  %136 = vmatprep.subr.mxu0 0.0
  %137 = vmatpush1.msra.mxu0 %v117
  %138 = vmatprep.subr.mxu0 0.0
  %139 = vmatpush1.msra.mxu0 %v118
  %140 = vmatprep.subr.mxu0 0.0
  %141 = vmatpush1.msra.mxu0 %v119
  %142 = vmatprep.subr.mxu0 0.0
  %143 = vmatpush1.msra.mxu0 0.0
  %144 = vmatprep.subr.mxu0 0.0
  %145 = vmatpush1.msra.mxu0 0.0
  %146 = vmatprep.subr.mxu0 0.0
  %147 = vmatpush1.msra.mxu0 0.0
  %148 = vmatprep.subr.mxu0 0.0
  %149 = vmatpush1.msra.mxu0 0.0
  %150 = vmatprep.subr.mxu0 0.0
  %151 = vmatpush1.msra.mxu0 0.0
  %152 = vmatprep.subr.mxu0 0.0
  %153 = vmatpush1.msra.mxu0 0.0
  %154 = vmatprep.subr.mxu0 0.0
  %155 = vmatpush1.msra.mxu0 0.0
  %156 = vmatprep.subr.mxu0 0.0
  %157 = vmatpush1.msra.mxu0 0.0
  %158 = vmatprep.subr.mxu0 0.0
  %159 = vmatpush1.msra.mxu0 0.0
  %160 = vmatprep.subr.mxu0 0.0
  %161 = vmatpush1.msra.mxu0 0.0
  %162 = vmatprep.subr.mxu0 0.0
  %163 = vmatpush1.msra.mxu0 0.0
  %164 = vmatprep.subr.mxu0 0.0
  %165 = vmatpush1.msra.mxu0 0.0
  %166 = vmatprep.subr.mxu0 0.0
  %167 = vmatpush1.msra.mxu0 0.0
  %168 = vmatprep.subr.mxu0 0.0
  %169 = vmatpush1.msra.mxu0 0.0
  %170 = vmatprep.subr.mxu0 0.0
  %171 = vmatpush1.msra.mxu0 0.0
  %172 = vmatprep.subr.mxu0 0.0
  %173 = vmatpush1.msra.mxu0 0.0
  %174 = vmatprep.subr.mxu0 0.0
  %175 = vmatpush1.msra.mxu0 0.0
  %176 = vmatprep.subr.mxu0 0.0
  %177 = vmatpush1.msra.mxu0 0.0
  %178 = vmatprep.subr.mxu0 0.0
  %179 = vmatpush1.msra.mxu0 0.0
  %180 = vmatprep.subr.mxu0 0.0
  %181 = vmatpush1.msra.mxu0 0.0
  %182 = vmatprep.subr.mxu0 0.0
  %183 = vmatpush1.msra.mxu0 0.0
  %184 = vmatprep.subr.mxu0 0.0
  %185 = vmatpush1.msra.mxu0 0.0
  %186 = vmatprep.subr.mxu0 0.0
  %187 = vmatpush1.msra.mxu0 0.0
  %188 = vmatprep.subr.mxu0 0.0
  %189 = vmatpush1.msra.mxu0 0.0
  %190 = vmatprep.subr.mxu0 0.0
  %191 = vmatpush1.msra.mxu0 0.0
  %192 = vmatprep.subr.mxu0 0.0
  %193 = vmatpush1.msra.mxu0 0.0
  %194 = vmatprep.subr.mxu0 0.0
  %195 = vmatpush1.msra.mxu0 0.0
  %196 = vmatprep.subr.mxu0 0.0
  %197 = vmatpush1.msra.mxu0 0.0
  %198 = vmatprep.mubr.f32.mxu0 0.0
  %199 = vmatmul.mubr.f32.gmra.mrb[0].mxu0 %v132
  %v200 = vpop.f32.mrb[0].mxu0
  %v201 = vadd.f32 0.0, %v200
  %v202 = vpop.f32.mrb[0].mxu0
  %203 = vdwg.mxu0
  %v204 = vadd.f32 %v129, %v201
  %v205 = vmul.f32 %v204, %v125
  %v206 = vtanh.pop %v205
  %v207 = vmul.f32 %v206, %v125
  %v208 = vadd.f32 %v207, %v126
  %210 = vrot.lane.b32.xlu0 %v128, 32
  %v211 = vpop.permute.xlu0 %210
  %v213 = vmul.f32 %v208, %v211
  %215 = vrot.lane.b32.xlu0 %v208, 64
  %v216 = vpop.permute.xlu0 %215
  %v218 = vmul.f32 %v208, %v216
  %220 = vrot.lane.b32.xlu0 %v218, 32
  %v221 = vpop.permute.xlu0 %220
  %v223 = vadd.f32 %v213, %v221
  %v224 = vtanh.pop %v223
  %226 = vrot.lane.b32.xlu0 %v224, 64
  %v227 = vpop.permute.xlu0 %226
  %v229 = vmul.f32 %v208, %v227
  %s230 = scalar_lea.vmem [#allocation2], 8
  %v231 = vld [vmem:[%s230] sm:$0xff]
  %233 = vrot.lane.b32.xlu0 %v229, 32
  %v234 = vpop.permute.xlu0 %233
  %v235 = vsel %vm130, %v234, 0
  %237 = vmatprep.subr.mxu0 0.0
  %238 = vmatpush1.msra.mxu0 %v116
  %239 = vmatprep.subr.mxu0 0.0
  %240 = vmatpush1.msra.mxu0 %v117
  %241 = vmatprep.subr.mxu0 0.0
  %242 = vmatpush1.msra.mxu0 %v118
  %243 = vmatprep.subr.mxu0 0.0
  %244 = vmatpush1.msra.mxu0 %v119
  %245 = vmatprep.subr.mxu0 0.0
  %246 = vmatpush1.msra.mxu0 0.0
  %247 = vmatprep.subr.mxu0 0.0
  %248 = vmatpush1.msra.mxu0 0.0
  %249 = vmatprep.subr.mxu0 0.0
  %250 = vmatpush1.msra.mxu0 0.0
  %251 = vmatprep.subr.mxu0 0.0
  %252 = vmatpush1.msra.mxu0 0.0
  %253 = vmatprep.subr.mxu0 0.0
  %254 = vmatpush1.msra.mxu0 0.0
  %255 = vmatprep.subr.mxu0 0.0
  %256 = vmatpush1.msra.mxu0 0.0
  %257 = vmatprep.subr.mxu0 0.0
  %258 = vmatpush1.msra.mxu0 0.0
  %259 = vmatprep.subr.mxu0 0.0
  %260 = vmatpush1.msra.mxu0 0.0
  %261 = vmatprep.subr.mxu0 0.0
  %262 = vmatpush1.msra.mxu0 0.0
  %263 = vmatprep.subr.mxu0 0.0
  %264 = vmatpush1.msra.mxu0 0.0
  %265 = vmatprep.subr.mxu0 0.0
  %266 = vmatpush1.msra.mxu0 0.0
  %267 = vmatprep.subr.mxu0 0.0
  %268 = vmatpush1.msra.mxu0 0.0
  %269 = vmatprep.subr.mxu0 0.0
  %270 = vmatpush1.msra.mxu0 0.0
  %271 = vmatprep.subr.mxu0 0.0
  %272 = vmatpush1.msra.mxu0 0.0
  %273 = vmatprep.subr.mxu0 0.0
  %274 = vmatpush1.msra.mxu0 0.0
  %275 = vmatprep.subr.mxu0 0.0
  %276 = vmatpush1.msra.mxu0 0.0
  %277 = vmatprep.subr.mxu0 0.0
  %278 = vmatpush1.msra.mxu0 0.0
  %279 = vmatprep.subr.mxu0 0.0
  %280 = vmatpush1.msra.mxu0 0.0
  %281 = vmatprep.subr.mxu0 0.0
  %282 = vmatpush1.msra.mxu0 0.0
  %283 = vmatprep.subr.mxu0 0.0
  %284 = vmatpush1.msra.mxu0 0.0
  %285 = vmatprep.subr.mxu0 0.0
  %286 = vmatpush1.msra.mxu0 0.0
  %287 = vmatprep.subr.mxu0 0.0
  %288 = vmatpush1.msra.mxu0 0.0
  %289 = vmatprep.subr.mxu0 0.0
  %290 = vmatpush1.msra.mxu0 0.0
  %291 = vmatprep.subr.mxu0 0.0
  %292 = vmatpush1.msra.mxu0 0.0
  %293 = vmatprep.subr.mxu0 0.0
  %294 = vmatpush1.msra.mxu0 0.0
  %295 = vmatprep.subr.mxu0 0.0
  %296 = vmatpush1.msra.mxu0 0.0
  %297 = vmatprep.subr.mxu0 0.0
  %298 = vmatpush1.msra.mxu0 0.0
  %299 = vmatprep.subr.mxu0 0.0
  %300 = vmatpush1.msra.mxu0 0.0
  %301 = vmatprep.mubr.f32.mxu0 0.0
  %302 = vmatmul.mubr.f32.gmra.mrb[0].mxu0 %v235
  %v303 = vpop.f32.mrb[0].mxu0
  %v304 = vadd.f32 0.0, %v303
  %v305 = vpop.f32.mrb[0].mxu0
  %306 = vdwg.mxu0
  %v307 = vadd.f32 %v231, %v304
  %v308 = vmul.f32 %v307, %v125
  %v309 = vtanh.pop %v308
  %v310 = vmul.f32 %v309, %v125
  %v311 = vadd.f32 %v310, %v126
  %v312 = vmul.f32 %v311, %v223
  %314 = vrot.lane.b32.xlu0 %v311, 64
  %v315 = vpop.permute.xlu0 %314
  %v317 = vmul.f32 %v311, %v315
  %319 = vrot.lane.b32.xlu0 %v317, 32
  %v320 = vpop.permute.xlu0 %319
  %v322 = vadd.f32 %v312, %v320
  %v323 = vtanh.pop %v322
  %325 = vrot.lane.b32.xlu0 %v323, 64
  %v326 = vpop.permute.xlu0 %325
  %v328 = vmul.f32 %v311, %v326
  %s329 = scalar_lea.vmem [#allocation2], 16
  %v330 = vld [vmem:[%s329] sm:$0xff]
  %332 = vrot.lane.b32.xlu0 %v328, 32
  %v333 = vpop.permute.xlu0 %332
  %v334 = vsel %vm130, %v333, 0
  %336 = vmatprep.subr.mxu0 0.0
  %337 = vmatpush1.msra.mxu0 %v116
  %338 = vmatprep.subr.mxu0 0.0
  %339 = vmatpush1.msra.mxu0 %v117
  %340 = vmatprep.subr.mxu0 0.0
  %341 = vmatpush1.msra.mxu0 %v118
  %342 = vmatprep.subr.mxu0 0.0
  %343 = vmatpush1.msra.mxu0 %v119
  %344 = vmatprep.subr.mxu0 0.0
  %345 = vmatpush1.msra.mxu0 0.0
  %346 = vmatprep.subr.mxu0 0.0
  %347 = vmatpush1.msra.mxu0 0.0
  %348 = vmatprep.subr.mxu0 0.0
  %349 = vmatpush1.msra.mxu0 0.0
  %350 = vmatprep.subr.mxu0 0.0
  %351 = vmatpush1.msra.mxu0 0.0
  %352 = vmatprep.subr.mxu0 0.0
  %353 = vmatpush1.msra.mxu0 0.0
  %354 = vmatprep.subr.mxu0 0.0
  %355 = vmatpush1.msra.mxu0 0.0
  %356 = vmatprep.subr.mxu0 0.0
  %357 = vmatpush1.msra.mxu0 0.0
  %358 = vmatprep.subr.mxu0 0.0
  %359 = vmatpush1.msra.mxu0 0.0
  %360 = vmatprep.subr.mxu0 0.0
  %361 = vmatpush1.msra.mxu0 0.0
  %362 = vmatprep.subr.mxu0 0.0
  %363 = vmatpush1.msra.mxu0 0.0
  %364 = vmatprep.subr.mxu0 0.0
  %365 = vmatpush1.msra.mxu0 0.0
  %366 = vmatprep.subr.mxu0 0.0
  %367 = vmatpush1.msra.mxu0 0.0
  %368 = vmatprep.subr.mxu0 0.0
  %369 = vmatpush1.msra.mxu0 0.0
  %370 = vmatprep.subr.mxu0 0.0
  %371 = vmatpush1.msra.mxu0 0.0
  %372 = vmatprep.subr.mxu0 0.0
  %373 = vmatpush1.msra.mxu0 0.0
  %374 = vmatprep.subr.mxu0 0.0
  %375 = vmatpush1.msra.mxu0 0.0
  %376 = vmatprep.subr.mxu0 0.0
  %377 = vmatpush1.msra.mxu0 0.0
  %378 = vmatprep.subr.mxu0 0.0
  %379 = vmatpush1.msra.mxu0 0.0
  %380 = vmatprep.subr.mxu0 0.0
  %381 = vmatpush1.msra.mxu0 0.0
  %382 = vmatprep.subr.mxu0 0.0
  %383 = vmatpush1.msra.mxu0 0.0
  %384 = vmatprep.subr.mxu0 0.0
  %385 = vmatpush1.msra.mxu0 0.0
  %386 = vmatprep.subr.mxu0 0.0
  %387 = vmatpush1.msra.mxu0 0.0
  %388 = vmatprep.subr.mxu0 0.0
  %389 = vmatpush1.msra.mxu0 0.0
  %390 = vmatprep.subr.mxu0 0.0
  %391 = vmatpush1.msra.mxu0 0.0
  %392 = vmatprep.subr.mxu0 0.0
  %393 = vmatpush1.msra.mxu0 0.0
  %394 = vmatprep.subr.mxu0 0.0
  %395 = vmatpush1.msra.mxu0 0.0
  %396 = vmatprep.subr.mxu0 0.0
  %397 = vmatpush1.msra.mxu0 0.0
  %398 = vmatprep.subr.mxu0 0.0
  %399 = vmatpush1.msra.mxu0 0.0
  %400 = vmatprep.mubr.f32.mxu0 0.0
  %401 = vmatmul.mubr.f32.gmra.mrb[0].mxu0 %v334
  %v402 = vpop.f32.mrb[0].mxu0
  %v403 = vadd.f32 0.0, %v402
  %v404 = vpop.f32.mrb[0].mxu0
  %405 = vdwg.mxu0
  %v406 = vadd.f32 %v330, %v403
  %v407 = vmul.f32 %v406, %v125
  %v408 = vtanh.pop %v407
  %v409 = vmul.f32 %v408, %v125
  %v410 = vadd.f32 %v409, %v126
  %v411 = vmul.f32 %v410, %v322
  %413 = vrot.lane.b32.xlu0 %v410, 64
  %v414 = vpop.permute.xlu0 %413
  %v416 = vmul.f32 %v410, %v414
  %418 = vrot.lane.b32.xlu0 %v416, 32
  %v419 = vpop.permute.xlu0 %418
  %v421 = vadd.f32 %v411, %v419
  %v422 = vtanh.pop %v421
  %424 = vrot.lane.b32.xlu0 %v422, 64
  %v425 = vpop.permute.xlu0 %424
  %v427 = vmul.f32 %v410, %v425
  %s428 = scalar_lea.vmem [#allocation2], 24
  %v429 = vld [vmem:[%s428] sm:$0xff]
  %431 = vrot.lane.b32.xlu0 %v427, 32
  %v432 = vpop.permute.xlu0 %431
  %v433 = vsel %vm130, %v432, 0
  %435 = vmatprep.subr.mxu0 0.0
  %436 = vmatpush1.msra.mxu0 %v116
  %437 = vmatprep.subr.mxu0 0.0
  %438 = vmatpush1.msra.mxu0 %v117
  %439 = vmatprep.subr.mxu0 0.0
  %440 = vmatpush1.msra.mxu0 %v118
  %441 = vmatprep.subr.mxu0 0.0
  %442 = vmatpush1.msra.mxu0 %v119
  %443 = vmatprep.subr.mxu0 0.0
  %444 = vmatpush1.msra.mxu0 0.0
  %445 = vmatprep.subr.mxu0 0.0
  %446 = vmatpush1.msra.mxu0 0.0
  %447 = vmatprep.subr.mxu0 0.0
  %448 = vmatpush1.msra.mxu0 0.0
  %449 = vmatprep.subr.mxu0 0.0
  %450 = vmatpush1.msra.mxu0 0.0
  %451 = vmatprep.subr.mxu0 0.0
  %452 = vmatpush1.msra.mxu0 0.0
  %453 = vmatprep.subr.mxu0 0.0
  %454 = vmatpush1.msra.mxu0 0.0
  %455 = vmatprep.subr.mxu0 0.0
  %456 = vmatpush1.msra.mxu0 0.0
  %457 = vmatprep.subr.mxu0 0.0
  %458 = vmatpush1.msra.mxu0 0.0
  %459 = vmatprep.subr.mxu0 0.0
  %460 = vmatpush1.msra.mxu0 0.0
  %461 = vmatprep.subr.mxu0 0.0
  %462 = vmatpush1.msra.mxu0 0.0
  %463 = vmatprep.subr.mxu0 0.0
  %464 = vmatpush1.msra.mxu0 0.0
  %465 = vmatprep.subr.mxu0 0.0
  %466 = vmatpush1.msra.mxu0 0.0
  %467 = vmatprep.subr.mxu0 0.0
  %468 = vmatpush1.msra.mxu0 0.0
  %469 = vmatprep.subr.mxu0 0.0
  %470 = vmatpush1.msra.mxu0 0.0
  %471 = vmatprep.subr.mxu0 0.0
  %472 = vmatpush1.msra.mxu0 0.0
  %473 = vmatprep.subr.mxu0 0.0
  %474 = vmatpush1.msra.mxu0 0.0
  %475 = vmatprep.subr.mxu0 0.0
  %476 = vmatpush1.msra.mxu0 0.0
  %477 = vmatprep.subr.mxu0 0.0
  %478 = vmatpush1.msra.mxu0 0.0
  %479 = vmatprep.subr.mxu0 0.0
  %480 = vmatpush1.msra.mxu0 0.0
  %481 = vmatprep.subr.mxu0 0.0
  %482 = vmatpush1.msra.mxu0 0.0
  %483 = vmatprep.subr.mxu0 0.0
  %484 = vmatpush1.msra.mxu0 0.0
  %485 = vmatprep.subr.mxu0 0.0
  %486 = vmatpush1.msra.mxu0 0.0
  %487 = vmatprep.subr.mxu0 0.0
  %488 = vmatpush1.msra.mxu0 0.0
  %489 = vmatprep.subr.mxu0 0.0
  %490 = vmatpush1.msra.mxu0 0.0
  %491 = vmatprep.subr.mxu0 0.0
  %492 = vmatpush1.msra.mxu0 0.0
  %493 = vmatprep.subr.mxu0 0.0
  %494 = vmatpush1.msra.mxu0 0.0
  %495 = vmatprep.subr.mxu0 0.0
  %496 = vmatpush1.msra.mxu0 0.0
  %497 = vmatprep.subr.mxu0 0.0
  %498 = vmatpush1.msra.mxu0 0.0
  %499 = vmatprep.mubr.f32.mxu0 0.0
  %500 = vmatmul.mubr.f32.gmra.mrb[0].mxu0 %v433
  %v501 = vpop.f32.mrb[0].mxu0
  %v502 = vadd.f32 0.0, %v501
  %v503 = vpop.f32.mrb[0].mxu0
  %504 = vdwg.mxu0
  %v505 = vadd.f32 %v429, %v502
  %v506 = vmul.f32 %v505, %v125
  %v507 = vtanh.pop %v506
  %v508 = vmul.f32 %v507, %v125
  %v509 = vadd.f32 %v508, %v126
  %v510 = vmul.f32 %v509, %v421
  %512 = vrot.lane.b32.xlu0 %v509, 64
  %v513 = vpop.permute.xlu0 %512
  %v515 = vmul.f32 %v509, %v513
  %517 = vrot.lane.b32.xlu0 %v515, 32
  %v518 = vpop.permute.xlu0 %517
  %v520 = vadd.f32 %v510, %v518
  %v521 = vtanh.pop %v520
  %523 = vrot.lane.b32.xlu0 %v521, 64
  %v524 = vpop.permute.xlu0 %523
  %v526 = vmul.f32 %v509, %v524
  %s527 = scalar_lea.vmem [#allocation2], 32
  %v528 = vld [vmem:[%s527] sm:$0xff]
  %530 = vrot.lane.b32.xlu0 %v526, 32
  %v531 = vpop.permute.xlu0 %530
  %v532 = vsel %vm130, %v531, 0
  %534 = vmatprep.subr.mxu0 0.0
  %535 = vmatpush1.msra.mxu0 %v116
  %536 = vmatprep.subr.mxu0 0.0
  %537 = vmatpush1.msra.mxu0 %v117
  %538 = vmatprep.subr.mxu0 0.0
  %539 = vmatpush1.msra.mxu0 %v118
  %540 = vmatprep.subr.mxu0 0.0
  %541 = vmatpush1.msra.mxu0 %v119
  %542 = vmatprep.subr.mxu0 0.0
  %543 = vmatpush1.msra.mxu0 0.0
  %544 = vmatprep.subr.mxu0 0.0
  %545 = vmatpush1.msra.mxu0 0.0
  %546 = vmatprep.subr.mxu0 0.0
  %547 = vmatpush1.msra.mxu0 0.0
  %548 = vmatprep.subr.mxu0 0.0
  %549 = vmatpush1.msra.mxu0 0.0
  %550 = vmatprep.subr.mxu0 0.0
  %551 = vmatpush1.msra.mxu0 0.0
  %552 = vmatprep.subr.mxu0 0.0
  %553 = vmatpush1.msra.mxu0 0.0
  %554 = vmatprep.subr.mxu0 0.0
  %555 = vmatpush1.msra.mxu0 0.0
  %556 = vmatprep.subr.mxu0 0.0
  %557 = vmatpush1.msra.mxu0 0.0
  %558 = vmatprep.subr.mxu0 0.0
  %559 = vmatpush1.msra.mxu0 0.0
  %560 = vmatprep.subr.mxu0 0.0
  %561 = vmatpush1.msra.mxu0 0.0
  %562 = vmatprep.subr.mxu0 0.0
  %563 = vmatpush1.msra.mxu0 0.0
  %564 = vmatprep.subr.mxu0 0.0
  %565 = vmatpush1.msra.mxu0 0.0
  %566 = vmatprep.subr.mxu0 0.0
  %567 = vmatpush1.msra.mxu0 0.0
  %568 = vmatprep.subr.mxu0 0.0
  %569 = vmatpush1.msra.mxu0 0.0
  %570 = vmatprep.subr.mxu0 0.0
  %571 = vmatpush1.msra.mxu0 0.0
  %572 = vmatprep.subr.mxu0 0.0
  %573 = vmatpush1.msra.mxu0 0.0
  %574 = vmatprep.subr.mxu0 0.0
  %575 = vmatpush1.msra.mxu0 0.0
  %576 = vmatprep.subr.mxu0 0.0
  %577 = vmatpush1.msra.mxu0 0.0
  %578 = vmatprep.subr.mxu0 0.0
  %579 = vmatpush1.msra.mxu0 0.0
  %580 = vmatprep.subr.mxu0 0.0
  %581 = vmatpush1.msra.mxu0 0.0
  %582 = vmatprep.subr.mxu0 0.0
  %583 = vmatpush1.msra.mxu0 0.0
  %584 = vmatprep.subr.mxu0 0.0
  %585 = vmatpush1.msra.mxu0 0.0
  %586 = vmatprep.subr.mxu0 0.0
  %587 = vmatpush1.msra.mxu0 0.0
  %588 = vmatprep.subr.mxu0 0.0
  %589 = vmatpush1.msra.mxu0 0.0
  %590 = vmatprep.subr.mxu0 0.0
  %591 = vmatpush1.msra.mxu0 0.0
  %592 = vmatprep.subr.mxu0 0.0
  %593 = vmatpush1.msra.mxu0 0.0
  %594 = vmatprep.subr.mxu0 0.0
  %595 = vmatpush1.msra.mxu0 0.0
  %596 = vmatprep.subr.mxu0 0.0
  %597 = vmatpush1.msra.mxu0 0.0
  %598 = vmatprep.mubr.f32.mxu0 0.0
  %599 = vmatmul.mubr.f32.gmra.mrb[0].mxu0 %v532
  %v600 = vpop.f32.mrb[0].mxu0
  %v601 = vadd.f32 0.0, %v600
  %v602 = vpop.f32.mrb[0].mxu0
  %603 = vdwg.mxu0
  %v604 = vadd.f32 %v528, %v601
  %v605 = vmul.f32 %v604, %v125
  %v606 = vtanh.pop %v605
  %v607 = vmul.f32 %v606, %v125
  %v608 = vadd.f32 %v607, %v126
  %v609 = vmul.f32 %v608, %v520
  %611 = vrot.lane.b32.xlu0 %v608, 64
  %v612 = vpop.permute.xlu0 %611
  %v614 = vmul.f32 %v608, %v612
  %616 = vrot.lane.b32.xlu0 %v614, 32
  %v617 = vpop.permute.xlu0 %616
  %v619 = vadd.f32 %v609, %v617
  %v620 = vtanh.pop %v619
  %622 = vrot.lane.b32.xlu0 %v620, 64
  %v623 = vpop.permute.xlu0 %622
  %v625 = vmul.f32 %v608, %v623
  %s626 = scalar_lea.vmem [#allocation2], 40
  %v627 = vld [vmem:[%s626] sm:$0xff]
  %629 = vrot.lane.b32.xlu0 %v625, 32
  %v630 = vpop.permute.xlu0 %629
  %v631 = vsel %vm130, %v630, 0
  %633 = vmatprep.subr.mxu0 0.0
  %634 = vmatpush1.msra.mxu0 %v116
  %635 = vmatprep.subr.mxu0 0.0
  %636 = vmatpush1.msra.mxu0 %v117
  %637 = vmatprep.subr.mxu0 0.0
  %638 = vmatpush1.msra.mxu0 %v118
  %639 = vmatprep.subr.mxu0 0.0
  %640 = vmatpush1.msra.mxu0 %v119
  %641 = vmatprep.subr.mxu0 0.0
  %642 = vmatpush1.msra.mxu0 0.0
  %643 = vmatprep.subr.mxu0 0.0
  %644 = vmatpush1.msra.mxu0 0.0
  %645 = vmatprep.subr.mxu0 0.0
  %646 = vmatpush1.msra.mxu0 0.0
  %647 = vmatprep.subr.mxu0 0.0
  %648 = vmatpush1.msra.mxu0 0.0
  %649 = vmatprep.subr.mxu0 0.0
  %650 = vmatpush1.msra.mxu0 0.0
  %651 = vmatprep.subr.mxu0 0.0
  %652 = vmatpush1.msra.mxu0 0.0
  %653 = vmatprep.subr.mxu0 0.0
  %654 = vmatpush1.msra.mxu0 0.0
  %655 = vmatprep.subr.mxu0 0.0
  %656 = vmatpush1.msra.mxu0 0.0
  %657 = vmatprep.subr.mxu0 0.0
  %658 = vmatpush1.msra.mxu0 0.0
  %659 = vmatprep.subr.mxu0 0.0
  %660 = vmatpush1.msra.mxu0 0.0
  %661 = vmatprep.subr.mxu0 0.0
  %662 = vmatpush1.msra.mxu0 0.0
  %663 = vmatprep.subr.mxu0 0.0
  %664 = vmatpush1.msra.mxu0 0.0
  %665 = vmatprep.subr.mxu0 0.0
  %666 = vmatpush1.msra.mxu0 0.0
  %667 = vmatprep.subr.mxu0 0.0
  %668 = vmatpush1.msra.mxu0 0.0
  %669 = vmatprep.subr.mxu0 0.0
  %670 = vmatpush1.msra.mxu0 0.0
  %671 = vmatprep.subr.mxu0 0.0
  %672 = vmatpush1.msra.mxu0 0.0
  %673 = vmatprep.subr.mxu0 0.0
  %674 = vmatpush1.msra.mxu0 0.0
  %675 = vmatprep.subr.mxu0 0.0
  %676 = vmatpush1.msra.mxu0 0.0
  %677 = vmatprep.subr.mxu0 0.0
  %678 = vmatpush1.msra.mxu0 0.0
  %679 = vmatprep.subr.mxu0 0.0
  %680 = vmatpush1.msra.mxu0 0.0
  %681 = vmatprep.subr.mxu0 0.0
  %682 = vmatpush1.msra.mxu0 0.0
  %683 = vmatprep.subr.mxu0 0.0
  %684 = vmatpush1.msra.mxu0 0.0
  %685 = vmatprep.subr.mxu0 0.0
  %686 = vmatpush1.msra.mxu0 0.0
  %687 = vmatprep.subr.mxu0 0.0
  %688 = vmatpush1.msra.mxu0 0.0
  %689 = vmatprep.subr.mxu0 0.0
  %690 = vmatpush1.msra.mxu0 0.0
  %691 = vmatprep.subr.mxu0 0.0
  %692 = vmatpush1.msra.mxu0 0.0
  %693 = vmatprep.subr.mxu0 0.0
  %694 = vmatpush1.msra.mxu0 0.0
  %695 = vmatprep.subr.mxu0 0.0
  %696 = vmatpush1.msra.mxu0 0.0
  %697 = vmatprep.mubr.f32.mxu0 0.0
  %698 = vmatmul.mubr.f32.gmra.mrb[0].mxu0 %v631
  %v699 = vpop.f32.mrb[0].mxu0
  %v700 = vadd.f32 0.0, %v699
  %v701 = vpop.f32.mrb[0].mxu0
  %702 = vdwg.mxu0
  %v703 = vadd.f32 %v627, %v700
  %v704 = vmul.f32 %v703, %v125
  %v705 = vtanh.pop %v704
  %v706 = vmul.f32 %v705, %v125
  %v707 = vadd.f32 %v706, %v126
  %v708 = vmul.f32 %v707, %v619
  %710 = vrot.lane.b32.xlu0 %v707, 64
  %v711 = vpop.permute.xlu0 %710
  %v713 = vmul.f32 %v707, %v711
  %715 = vrot.lane.b32.xlu0 %v713, 32
  %v716 = vpop.permute.xlu0 %715
  %v718 = vadd.f32 %v708, %v716
  %v719 = vtanh.pop %v718
  %721 = vrot.lane.b32.xlu0 %v719, 64
  %v722 = vpop.permute.xlu0 %721
  %v724 = vmul.f32 %v707, %v722
  %s725 = scalar_lea.vmem [#allocation2], 48
  %v726 = vld [vmem:[%s725] sm:$0xff]
  %728 = vrot.lane.b32.xlu0 %v724, 32
  %v729 = vpop.permute.xlu0 %728
  %v730 = vsel %vm130, %v729, 0
  %732 = vmatprep.subr.mxu0 0.0
  %733 = vmatpush1.msra.mxu0 %v116
  %734 = vmatprep.subr.mxu0 0.0
  %735 = vmatpush1.msra.mxu0 %v117
  %736 = vmatprep.subr.mxu0 0.0
  %737 = vmatpush1.msra.mxu0 %v118
  %738 = vmatprep.subr.mxu0 0.0
  %739 = vmatpush1.msra.mxu0 %v119
  %740 = vmatprep.subr.mxu0 0.0
  %741 = vmatpush1.msra.mxu0 0.0
  %742 = vmatprep.subr.mxu0 0.0
  %743 = vmatpush1.msra.mxu0 0.0
  %744 = vmatprep.subr.mxu0 0.0
  %745 = vmatpush1.msra.mxu0 0.0
  %746 = vmatprep.subr.mxu0 0.0
  %747 = vmatpush1.msra.mxu0 0.0
  %748 = vmatprep.subr.mxu0 0.0
  %749 = vmatpush1.msra.mxu0 0.0
  %750 = vmatprep.subr.mxu0 0.0
  %751 = vmatpush1.msra.mxu0 0.0
  %752 = vmatprep.subr.mxu0 0.0
  %753 = vmatpush1.msra.mxu0 0.0
  %754 = vmatprep.subr.mxu0 0.0
  %755 = vmatpush1.msra.mxu0 0.0
  %756 = vmatprep.subr.mxu0 0.0
  %757 = vmatpush1.msra.mxu0 0.0
  %758 = vmatprep.subr.mxu0 0.0
  %759 = vmatpush1.msra.mxu0 0.0
  %760 = vmatprep.subr.mxu0 0.0
  %761 = vmatpush1.msra.mxu0 0.0
  %762 = vmatprep.subr.mxu0 0.0
  %763 = vmatpush1.msra.mxu0 0.0
  %764 = vmatprep.subr.mxu0 0.0
  %765 = vmatpush1.msra.mxu0 0.0
  %766 = vmatprep.subr.mxu0 0.0
  %767 = vmatpush1.msra.mxu0 0.0
  %768 = vmatprep.subr.mxu0 0.0
  %769 = vmatpush1.msra.mxu0 0.0
  %770 = vmatprep.subr.mxu0 0.0
  %771 = vmatpush1.msra.mxu0 0.0
  %772 = vmatprep.subr.mxu0 0.0
  %773 = vmatpush1.msra.mxu0 0.0
  %774 = vmatprep.subr.mxu0 0.0
  %775 = vmatpush1.msra.mxu0 0.0
  %776 = vmatprep.subr.mxu0 0.0
  %777 = vmatpush1.msra.mxu0 0.0
  %778 = vmatprep.subr.mxu0 0.0
  %779 = vmatpush1.msra.mxu0 0.0
  %780 = vmatprep.subr.mxu0 0.0
  %781 = vmatpush1.msra.mxu0 0.0
  %782 = vmatprep.subr.mxu0 0.0
  %783 = vmatpush1.msra.mxu0 0.0
  %784 = vmatprep.subr.mxu0 0.0
  %785 = vmatpush1.msra.mxu0 0.0
  %786 = vmatprep.subr.mxu0 0.0
  %787 = vmatpush1.msra.mxu0 0.0
  %788 = vmatprep.subr.mxu0 0.0
  %789 = vmatpush1.msra.mxu0 0.0
  %790 = vmatprep.subr.mxu0 0.0
  %791 = vmatpush1.msra.mxu0 0.0
  %792 = vmatprep.subr.mxu0 0.0
  %793 = vmatpush1.msra.mxu0 0.0
  %794 = vmatprep.subr.mxu0 0.0
  %795 = vmatpush1.msra.mxu0 0.0
  %796 = vmatprep.mubr.f32.mxu0 0.0
  %797 = vmatmul.mubr.f32.gmra.mrb[0].mxu0 %v730
  %v798 = vpop.f32.mrb[0].mxu0
  %v799 = vadd.f32 0.0, %v798
  %v800 = vpop.f32.mrb[0].mxu0
  %801 = vdwg.mxu0
  %v802 = vadd.f32 %v726, %v799
  %v803 = vmul.f32 %v802, %v125
  %v804 = vtanh.pop %v803
  %v805 = vmul.f32 %v804, %v125
  %v806 = vadd.f32 %v805, %v126
  %v807 = vmul.f32 %v806, %v718
  %809 = vrot.lane.b32.xlu0 %v806, 64
  %v810 = vpop.permute.xlu0 %809
  %v812 = vmul.f32 %v806, %v810
  %814 = vrot.lane.b32.xlu0 %v812, 32
  %v815 = vpop.permute.xlu0 %814
  %v817 = vadd.f32 %v807, %v815
  %v818 = vtanh.pop %v817
  %820 = vrot.lane.b32.xlu0 %v818, 64
  %v821 = vpop.permute.xlu0 %820
  %v823 = vmul.f32 %v806, %v821
  %s824 = scalar_lea.vmem [#allocation2], 56
  %v825 = vld [vmem:[%s824] sm:$0xff]
  %827 = vrot.lane.b32.xlu0 %v823, 32
  %v828 = vpop.permute.xlu0 %827
  %v829 = vsel %vm130, %v828, 0
  %831 = vmatprep.subr.mxu0 0.0
  %832 = vmatpush1.msra.mxu0 %v116
  %833 = vmatprep.subr.mxu0 0.0
  %834 = vmatpush1.msra.mxu0 %v117
  %835 = vmatprep.subr.mxu0 0.0
  %836 = vmatpush1.msra.mxu0 %v118
  %837 = vmatprep.subr.mxu0 0.0
  %838 = vmatpush1.msra.mxu0 %v119
  %839 = vmatprep.subr.mxu0 0.0
  %840 = vmatpush1.msra.mxu0 0.0
  %841 = vmatprep.subr.mxu0 0.0
  %842 = vmatpush1.msra.mxu0 0.0
  %843 = vmatprep.subr.mxu0 0.0
  %844 = vmatpush1.msra.mxu0 0.0
  %845 = vmatprep.subr.mxu0 0.0
  %846 = vmatpush1.msra.mxu0 0.0
  %847 = vmatprep.subr.mxu0 0.0
  %848 = vmatpush1.msra.mxu0 0.0
  %849 = vmatprep.subr.mxu0 0.0
  %850 = vmatpush1.msra.mxu0 0.0
  %851 = vmatprep.subr.mxu0 0.0
  %852 = vmatpush1.msra.mxu0 0.0
  %853 = vmatprep.subr.mxu0 0.0
  %854 = vmatpush1.msra.mxu0 0.0
  %855 = vmatprep.subr.mxu0 0.0
  %856 = vmatpush1.msra.mxu0 0.0
  %857 = vmatprep.subr.mxu0 0.0
  %858 = vmatpush1.msra.mxu0 0.0
  %859 = vmatprep.subr.mxu0 0.0
  %860 = vmatpush1.msra.mxu0 0.0
  %861 = vmatprep.subr.mxu0 0.0
  %862 = vmatpush1.msra.mxu0 0.0
  %863 = vmatprep.subr.mxu0 0.0
  %864 = vmatpush1.msra.mxu0 0.0
  %865 = vmatprep.subr.mxu0 0.0
  %866 = vmatpush1.msra.mxu0 0.0
  %867 = vmatprep.subr.mxu0 0.0
  %868 = vmatpush1.msra.mxu0 0.0
  %869 = vmatprep.subr.mxu0 0.0
  %870 = vmatpush1.msra.mxu0 0.0
  %871 = vmatprep.subr.mxu0 0.0
  %872 = vmatpush1.msra.mxu0 0.0
  %873 = vmatprep.subr.mxu0 0.0
  %874 = vmatpush1.msra.mxu0 0.0
  %875 = vmatprep.subr.mxu0 0.0
  %876 = vmatpush1.msra.mxu0 0.0
  %877 = vmatprep.subr.mxu0 0.0
  %878 = vmatpush1.msra.mxu0 0.0
  %879 = vmatprep.subr.mxu0 0.0
  %880 = vmatpush1.msra.mxu0 0.0
  %881 = vmatprep.subr.mxu0 0.0
  %882 = vmatpush1.msra.mxu0 0.0
  %883 = vmatprep.subr.mxu0 0.0
  %884 = vmatpush1.msra.mxu0 0.0
  %885 = vmatprep.subr.mxu0 0.0
  %886 = vmatpush1.msra.mxu0 0.0
  %887 = vmatprep.subr.mxu0 0.0
  %888 = vmatpush1.msra.mxu0 0.0
  %889 = vmatprep.subr.mxu0 0.0
  %890 = vmatpush1.msra.mxu0 0.0
  %891 = vmatprep.subr.mxu0 0.0
  %892 = vmatpush1.msra.mxu0 0.0
  %893 = vmatprep.subr.mxu0 0.0
  %894 = vmatpush1.msra.mxu0 0.0
  %895 = vmatprep.mubr.f32.mxu0 0.0
  %896 = vmatmul.mubr.f32.gmra.mrb[0].mxu0 %v829
  %v897 = vpop.f32.mrb[0].mxu0
  %v898 = vadd.f32 0.0, %v897
  %v899 = vpop.f32.mrb[0].mxu0
  %900 = vdwg.mxu0
  %v901 = vadd.f32 %v825, %v898
  %v902 = vmul.f32 %v901, %v125
  %v903 = vtanh.pop %v902
  %v904 = vmul.f32 %v903, %v125
  %v905 = vadd.f32 %v904, %v126
  %v906 = vmul.f32 %v905, %v817
  %908 = vrot.lane.b32.xlu0 %v905, 64
  %v909 = vpop.permute.xlu0 %908
  %v911 = vmul.f32 %v905, %v909
  %913 = vrot.lane.b32.xlu0 %v911, 32
  %v914 = vpop.permute.xlu0 %913
  %v916 = vadd.f32 %v906, %v914
  %v917 = vtanh.pop %v916
  %919 = vrot.lane.b32.xlu0 %v917, 64
  %v920 = vpop.permute.xlu0 %919
  %v922 = vmul.f32 %v905, %v920
  %924 = vrot.lane.b32.xlu0 %v922, 32
  %v925 = vpop.permute.xlu0 %924
  %927 = vst.msk [vmem:[#allocation3] sm:$0xff] %vm130, %v925
  %929 = vrot.lane.b32.xlu0 %v916, 96
  %v930 = vpop.permute.xlu0 %929
  %932 = vst.msk [vmem:[#allocation4] sm:$0xff] %vm130, %v930
  // Predicated region
  $region30: #{tpu_custom_call.1} parent=0 // pred_check
    %p933 = pneg %p23
  $region31: #{tpu_custom_call.1} parent=0 // pred_check_branch
    %935 = sbr.rel (%p933) target = $region33
  $region32: #{tpu_custom_call.1} parent=0 // pred_region
    %v936 = vld [vmem:[%s4] sm:$0xff]
    %v937 = vld [vmem:[%s4 + $0x8] sm:$0xff]
    %v938 = vld [vmem:[%s4 + $0x10] sm:$0xff]
    %v939 = vld [vmem:[%s4 + $0x18] sm:$0xff]
    %v940 = vld [vmem:[%s5] sm:$0x1]
    %v942 = vlaneseq
    %v943 = vshrl.u32 %v942, 7
    %v944 = vsub.s32 0, %v943
    %v945 = vrot.slane %v940, %v944
    %v947 = vsel %vm130, %v925, 0
    %949 = vmatprep.subr.mxu0 0.0
    %950 = vmatpush1.msra.mxu0 %v936
    %951 = vmatprep.subr.mxu0 0.0
    %952 = vmatpush1.msra.mxu0 %v937
    %953 = vmatprep.subr.mxu0 0.0
    %954 = vmatpush1.msra.mxu0 %v938
    %955 = vmatprep.subr.mxu0 0.0
    %956 = vmatpush1.msra.mxu0 %v939
    %957 = vmatprep.subr.mxu0 0.0
    %958 = vmatpush1.msra.mxu0 0.0
    %959 = vmatprep.subr.mxu0 0.0
    %960 = vmatpush1.msra.mxu0 0.0
    %961 = vmatprep.subr.mxu0 0.0
    %962 = vmatpush1.msra.mxu0 0.0
    %963 = vmatprep.subr.mxu0 0.0
    %964 = vmatpush1.msra.mxu0 0.0
    %965 = vmatprep.subr.mxu0 0.0
    %966 = vmatpush1.msra.mxu0 0.0
    %967 = vmatprep.subr.mxu0 0.0
    %968 = vmatpush1.msra.mxu0 0.0
    %969 = vmatprep.subr.mxu0 0.0
    %970 = vmatpush1.msra.mxu0 0.0
    %971 = vmatprep.subr.mxu0 0.0
    %972 = vmatpush1.msra.mxu0 0.0
    %973 = vmatprep.subr.mxu0 0.0
    %974 = vmatpush1.msra.mxu0 0.0
    %975 = vmatprep.subr.mxu0 0.0
    %976 = vmatpush1.msra.mxu0 0.0
    %977 = vmatprep.subr.mxu0 0.0
    %978 = vmatpush1.msra.mxu0 0.0
    %979 = vmatprep.subr.mxu0 0.0
    %980 = vmatpush1.msra.mxu0 0.0
    %981 = vmatprep.subr.mxu0 0.0
    %982 = vmatpush1.msra.mxu0 0.0
    %983 = vmatprep.subr.mxu0 0.0
    %984 = vmatpush1.msra.mxu0 0.0
    %985 = vmatprep.subr.mxu0 0.0
    %986 = vmatpush1.msra.mxu0 0.0
    %987 = vmatprep.subr.mxu0 0.0
    %988 = vmatpush1.msra.mxu0 0.0
    %989 = vmatprep.subr.mxu0 0.0
    %990 = vmatpush1.msra.mxu0 0.0
    %991 = vmatprep.subr.mxu0 0.0
    %992 = vmatpush1.msra.mxu0 0.0
    %993 = vmatprep.subr.mxu0 0.0
    %994 = vmatpush1.msra.mxu0 0.0
    %995 = vmatprep.subr.mxu0 0.0
    %996 = vmatpush1.msra.mxu0 0.0
    %997 = vmatprep.subr.mxu0 0.0
    %998 = vmatpush1.msra.mxu0 0.0
    %999 = vmatprep.subr.mxu0 0.0
    %1000 = vmatpush1.msra.mxu0 0.0
    %1001 = vmatprep.subr.mxu0 0.0
    %1002 = vmatpush1.msra.mxu0 0.0
    %1003 = vmatprep.subr.mxu0 0.0
    %1004 = vmatpush1.msra.mxu0 0.0
    %1005 = vmatprep.subr.mxu0 0.0
    %1006 = vmatpush1.msra.mxu0 0.0
    %1007 = vmatprep.subr.mxu0 0.0
    %1008 = vmatpush1.msra.mxu0 0.0
    %1009 = vmatprep.subr.mxu0 0.0
    %1010 = vmatpush1.msra.mxu0 0.0
    %1011 = vmatprep.subr.mxu0 0.0
    %1012 = vmatpush1.msra.mxu0 0.0
    %1013 = vmatprep.mubr.f32.mxu0 0.0
    %1014 = vmatmul.mubr.f32.gmra.mrb[0].mxu0 %v947
    %v1015 = vpop.f32.mrb[0].mxu0
    %v1016 = vadd.f32 %v945, %v1015
    %v1017 = vpop.f32.mrb[0].mxu0
    %1018 = vdwg.mxu0
    %vm1019 = vcmask 15360
    %1020 = vst.msk [vmem:[%s6] sm:$0xff] %vm1019, %v1016
  $region33: #{tpu_custom_call.1} parent=0 // pred_fallthru
    _
  // Predicated region
  $region34: #{tpu_custom_call.1} parent=0 // pred_check
    _
  $region35: #{tpu_custom_call.1} parent=0 // pred_check_branch
    %1022 = sbr.rel (0) target = $region37
  $region36: #{tpu_custom_call.1} parent=0 // pred_region
    _
  $region37: #{tpu_custom_call.1} parent=0 // pred_fallthru
    _
  // Predicated region
  $region38: #{tpu_custom_call.1} parent=0 // pred_check
    _
  $region39: #{tpu_custom_call.1} parent=0 // pred_check_branch
    %1024 = sbr.rel (0) target = $region41
  $region40: #{tpu_custom_call.1} parent=0 // pred_region
    _
  $region41: #{tpu_custom_call.1} parent=0 // pred_fallthru
    _

</llo_original>
